<compile_context>
chip_gen: v7x
topology: tpu7x:2x2x1
jax: 0.10.0
libtpu: 0.0.40
codegen_flags: <defaults>
</compile_context>

<pallas_src>
import functools

import jax
import jax.numpy as jnp
from jax.experimental import pallas as pl
from jax.experimental.pallas import tpu as pltpu

BN_EPS = 1e-5
_LANE = 128
_SUBLANE = 8
_CORE_SPLIT = 2          # per-core stats partials -> pass 1 fully "parallel" on v7x's 2 TCs
_MIB = 1024 * 1024


def _round_up(x, m):
    return ((x + m - 1) // m) * m


def _vmem_budget():
    """Generation-aware VMEM budgets (v5e/v6e: 128 MiB physical, v7x: 64 MiB per TensorCore)."""
    try:
        phys = int(pltpu.get_tpu_info().vmem_capacity_bytes)
    except Exception:  # conservative fallback sized for v7x's 64 MiB per-TC VMEM
        phys = 64 * _MIB
    phys = max(phys, 32 * _MIB)
    budget = int(phys * 0.60)                        # tile-picker working-set target
    limit_cap = min(int(phys * 0.75), 96 * _MIB)     # scoped-VMEM request ceiling
    return budget, limit_cap


def _pick_tile_m(tile_m, m_rows, k_pad, tile_n, in_bytes, y_bytes, budget):
    """Largest M-tile (multiple of 128, capped by caller's tile_m) whose double-buffered
    working set (patches + y tile + resident weight block) fits the VMEM budget."""
    weight_bytes = 2 * k_pad * tile_n * in_bytes           # pipeliner reserves 2 buffers
    per_row = 2 * (k_pad * in_bytes + tile_n * y_bytes)    # patches + y, double-buffered
    avail = budget - weight_bytes
    if avail > per_row * _LANE:
        tile_m = min(tile_m, avail // per_row)
    else:
        tile_m = _LANE       # weights dominate; fall back to minimum tile + vmem headroom
    tile_m = min(tile_m, _round_up(max(m_rows, 1), _LANE))
    tile_m = max(_LANE, (int(tile_m) // _LANE) * _LANE)
    return tile_m


def _matmul_stats_kernel(p_ref, w_ref, y_ref, sum_ref, sumsq_ref):
    """Pass 1: conv-as-matmul on the MXU + per-(core-split, Cout-block) sum / sum-sq partials.

    The stats blocks are (8, tile_n) resident slabs (one per (split, Cout-block) pair); every row
    carries the same partial sum (full-block broadcast accumulate avoids masked sub-row stores);
    the epilogue reads row 0 of each slab.
    """
    @pl.when(pl.program_id(2) == 0)
    def _():
        sum_ref[...] = jnp.zeros_like(sum_ref)
        sumsq_ref[...] = jnp.zeros_like(sumsq_ref)

    y = jnp.dot(p_ref[...], w_ref[...], preferred_element_type=jnp.float32)  # (tile_m, tile_n) f32
    y_ref[...] = y.astype(y_ref.dtype)

    # TODO(synk): E[y^2]-E[y]^2 can cancel badly when |mean| >> std at very large M; a shifted /
    #             Welford-style accumulation would be more robust.
    sum_ref[...] += jnp.sum(y, axis=0, keepdims=True)
    sumsq_ref[...] += jnp.sum(y * y, axis=0, keepdims=True)


def _bn_relu_kernel(y_ref, scale_ref, shift_ref, o_ref):
    """Pass 2: folded BN affine (out = y*scale + shift) + ReLU, lane-dense f32 stores."""
    y = y_ref[...].astype(jnp.float32)
    o_ref[...] = jnp.maximum(y * scale_ref[...] + shift_ref[...], 0.0)


def _im2col(x_nchw, kh, kw, stride, padding, dilation):
    """Plain-JAX glue: NCHW -> im2col patch matrix (M, K) with K ordered (kh, kw, Cin)."""
    n, cin, h, w = x_nchw.shape
    ho = (h + 2 * padding - dilation * (kh - 1) - 1) // stride + 1
    wo = (w + 2 * padding - dilation * (kw - 1) - 1) // stride + 1

    x_nhwc = jnp.transpose(x_nchw, (0, 2, 3, 1))                       # (N, H, W, Cin)
    x_pad = jnp.pad(x_nhwc, ((0, 0), (padding, padding), (padding, padding), (0, 0)))

    cols = []
    for i in range(kh):
        for j in range(kw):
            hi0 = i * dilation
            wj0 = j * dilation
            patch = x_pad[:,
                          hi0: hi0 + (ho - 1) * stride + 1: stride,
                          wj0: wj0 + (wo - 1) * stride + 1: stride,
                          :]                                            # (N, Ho, Wo, Cin)
            cols.append(patch)
    patches = jnp.stack(cols, axis=3).reshape(n * ho * wo, kh * kw * cin)
    return patches, ho, wo


@functools.partial(jax.jit,
                   static_argnames=("stride", "padding", "dilation", "tile_m", "compute_dtype"))
def conv_bn_relu(x_nchw, conv_weight, bn_gamma, bn_beta, *,
                 stride=1, padding=0, dilation=1, tile_m=1024,
                 compute_dtype=jnp.bfloat16):
    """x_nchw: (N, Cin, H, W). conv_weight: (Cout, Cin, kh, kw). Returns (N, Cout, Ho, Wo) f32.

    compute_dtype=jnp.bfloat16 (default) runs the MXU at bf16 with f32 accumulation;
    compute_dtype=jnp.float32 is the bit-parity mode vs. the f32 PyTorch reference.
    """
    n = x_nchw.shape[0]
    cout, cin, kh, kw = conv_weight.shape
    compute_dtype = jnp.dtype(compute_dtype)
    is_bf16 = compute_dtype == jnp.dtype(jnp.bfloat16)
    in_bytes = compute_dtype.itemsize
    y_dtype = compute_dtype            # bf16 y intermediate halves pass-1 write / pass-2 read
    y_bytes = in_bytes

    patches, ho, wo = _im2col(x_nchw.astype(jnp.float32), kh, kw, stride, padding, dilation)
    m_rows, k_dim = patches.shape

    # Lane-dense Cout; K padded to the MXU contraction depth (256 on bf16 chips) only when K is
    # already >= 128 so tiny-K layers don't pay extra HBM traffic.
    cout_pad = _round_up(max(cout, _LANE), _LANE)
    if k_dim >= _LANE:
        k_align = 256 if is_bf16 else _LANE
    else:
        k_align = 2 * _SUBLANE if is_bf16 else _SUBLANE
    k_pad = _round_up(k_dim, k_align)

    budget, limit_cap = _vmem_budget()

    # Cout (N) tiling: bound weight-block residency (matters under v7x's 64 MiB VMEM).
    tile_n = _LANE
    for cand in (512, 384, 256, 128):
        if cout_pad % cand == 0:
            tile_n = cand
            break
    num_n = cout_pad // tile_n

    tile_m = _pick_tile_m(tile_m, m_rows, k_pad, tile_n, in_bytes, y_bytes, budget)
    m_pad = _round_up(m_rows, _CORE_SPLIT * tile_m)
    num_m_per_core = m_pad // (_CORE_SPLIT * tile_m)

    # Zero-pad M (extra rows give y == 0 -> contribute nothing to the sums) and K / Cout.
    patches = jnp.pad(patches, ((0, m_pad - m_rows), (0, k_pad - k_dim))).astype(compute_dtype)
    w_mat = jnp.transpose(conv_weight.astype(jnp.float32), (2, 3, 1, 0)).reshape(k_dim, cout)
    w_mat = jnp.pad(w_mat, ((0, k_pad - k_dim), (0, cout_pad - cout))).astype(compute_dtype)

    # Pass-2 gets its own, larger M tile (it only holds one input and one output tile).
    per_row2 = 2 * cout_pad * (y_bytes + 4)
    tile_m2 = tile_m
    while (m_pad % (2 * tile_m2) == 0) and (2 * tile_m2 * per_row2 <= budget) and (tile_m2 < 4096):
        tile_m2 *= 2
    num_tiles2 = m_pad // tile_m2

    vmem_est1 = (2 * tile_m * k_pad * in_bytes            # patches, double-buffered
                 + 2 * tile_m * tile_n * y_bytes          # y tile, double-buffered
                 + 2 * k_pad * tile_n * in_bytes          # weight block (constant index, 2 bufs)
                 + 4 * _CORE_SPLIT * _SUBLANE * tile_n * 4)
    vmem_est2 = tile_m2 * per_row2 + 4 * cout_pad * 4
    vmem_limit = int(min(max(2 * max(vmem_est1, vmem_est2), 16 * _MIB), limit_cap))

    # ---------------- Pass 1: matmul + per-channel batch-stat partials ----------------
    y_flat, stats_sum, stats_sumsq = pl.pallas_call(
        _matmul_stats_kernel,
        out_shape=(
            jax.ShapeDtypeStruct((m_pad, cout_pad), y_dtype),
            jax.ShapeDtypeStruct((_CORE_SPLIT * _SUBLANE, cout_pad), jnp.float32),
            jax.ShapeDtypeStruct((_CORE_SPLIT * _SUBLANE, cout_pad), jnp.float32),
        ),
        grid=(_CORE_SPLIT, num_n, num_m_per_core),
        in_specs=[
            pl.BlockSpec((tile_m, k_pad), lambda c, nb, i: (c * num_m_per_core + i, 0)),
            pl.BlockSpec((k_pad, tile_n), lambda c, nb, i: (0, nb)),
        ],
        out_specs=(
            pl.BlockSpec((tile_m, tile_n), lambda c, nb, i: (c * num_m_per_core + i, nb)),
            pl.BlockSpec((_SUBLANE, tile_n), lambda c, nb, i: (c, nb)),   # resident over i
            pl.BlockSpec((_SUBLANE, tile_n), lambda c, nb, i: (c, nb)),   # resident over i
        ),
        compiler_params=pltpu.CompilerParams(
            dimension_semantics=("parallel", "parallel", "arbitrary"),
            vmem_limit_bytes=vmem_limit,
        ),
    )(patches, w_mat)

    # ---------------- Tiny JAX epilogue: BN(training) batch stats + folded affine ----------------
    ch_sum = jnp.zeros((1, cout_pad), jnp.float32)
    ch_sumsq = jnp.zeros((1, cout_pad), jnp.float32)
    for c in range(_CORE_SPLIT):
        ch_sum = ch_sum + stats_sum[c * _SUBLANE: c * _SUBLANE + 1, :]
        ch_sumsq = ch_sumsq + stats_sumsq[c * _SUBLANE: c * _SUBLANE + 1, :]

    gamma_pad = jnp.pad(bn_gamma.astype(jnp.float32).reshape(1, cout),
                        ((0, 0), (0, cout_pad - cout)))
    beta_pad = jnp.pad(bn_beta.astype(jnp.float32).reshape(1, cout),
                       ((0, 0), (0, cout_pad - cout)))

    inv_m = jnp.float32(1.0 / float(m_rows))       # true M -> padded zero rows don't bias stats
    mean = ch_sum * inv_m
    var = jnp.maximum(ch_sumsq * inv_m - mean * mean, 0.0)   # biased variance (PyTorch BN fwd)
    scale = gamma_pad * jax.lax.rsqrt(var + BN_EPS)
    shift = beta_pad - mean * scale

    # ---------------- Pass 2: folded BN affine + ReLU (pure HBM streaming) ----------------
    # TODO(synk): input_output_aliases could drop the extra HBM allocation, but y_flat is bf16
    #             while the final output stays f32, so dtypes don't match for aliasing.
    out_flat = pl.pallas_call(
        _bn_relu_kernel,
        out_shape=jax.ShapeDtypeStruct((m_pad, cout_pad), jnp.float32),
        grid=(num_tiles2,),
        in_specs=[
            pl.BlockSpec((tile_m2, cout_pad), lambda i: (i, 0)),
            pl.BlockSpec((1, cout_pad), lambda i: (0, 0)),
            pl.BlockSpec((1, cout_pad), lambda i: (0, 0)),
        ],
        out_specs=pl.BlockSpec((tile_m2, cout_pad), lambda i: (i, 0)),
        compiler_params=pltpu.CompilerParams(
            dimension_semantics=("parallel",),        # independent M tiles (megacore on v7x)
            vmem_limit_bytes=vmem_limit,
        ),
    )(y_flat, scale, shift)

    # Strip padding, (M, Cout) -> (N, Ho, Wo, Cout) -> NCHW (matches the PyTorch module layout).
    y = out_flat[:m_rows, :cout].reshape(n, ho, wo, cout)
    return jnp.transpose(y, (0, 3, 1, 2))


def _reference(x_nchw, conv_weight, bn_gamma, bn_beta, stride, padding, dilation):
    """Pure-JAX reference mirroring torch: Conv2d (no bias) -> BatchNorm2d(train) -> ReLU."""
    y = jax.lax.conv_general_dilated(
        x_nchw, conv_weight,
        window_strides=(stride, stride),
        padding=((padding, padding), (padding, padding)),
        rhs_dilation=(dilation, dilation),
        dimension_numbers=("NCHW", "OIHW", "NCHW"))
    mean = jnp.mean(y, axis=(0, 2, 3), keepdims=True)
    var = jnp.mean((y - mean) ** 2, axis=(0, 2, 3), keepdims=True)
    yn = (y - mean) * jax.lax.rsqrt(var + BN_EPS)
    out = yn * bn_gamma.reshape(1, -1, 1, 1) + bn_beta.reshape(1, -1, 1, 1)
    return jnp.maximum(out, 0.0)


if __name__ == "__main__":
    # Small shapes consistent with the module: N=2, Cin=4, H=W=16, Cout=8, 3x3, stride=1, pad=1.
    N, CIN, H, W = 2, 4, 16, 16
    COUT, KH, KW = 8, 3, 3
    STRIDE, PAD, DIL = 1, 1, 1

    key = jax.random.PRNGKey(0)
    kx, kw_, kg, kb = jax.random.split(key, 4)
    x = jax.random.normal(kx, (N, CIN, H, W), dtype=jnp.float32)
    conv_w = jax.random.normal(kw_, (COUT, CIN, KH, KW), dtype=jnp.float32) * 0.1
    # PyTorch BatchNorm2d default init is weight=1, bias=0; perturb deterministically so the
    # affine path is actually exercised.
    gamma = 1.0 + 0.1 * jax.random.normal(kg, (COUT,), dtype=jnp.float32)
    beta = 0.1 * jax.random.normal(kb, (COUT,), dtype=jnp.float32)

    ref = _reference(x, conv_w, gamma, beta, STRIDE, PAD, DIL)

    # bf16 MXU path (the performance default): tile_m=128 so the toy M=512 runs a multi-step
    # grid (exercises the core-split + streamed stats accumulation). Relaxed tolerance.
    out_bf16 = conv_bn_relu(x, conv_w, gamma, beta,
                            stride=STRIDE, padding=PAD, dilation=DIL,
                            tile_m=128, compute_dtype=jnp.bfloat16)
    out_bf16 = jax.block_until_ready(out_bf16)
    assert out_bf16.shape == (N, COUT, H, W)
    assert jnp.allclose(out_bf16, ref, atol=5e-2, rtol=5e-2), \
        float(jnp.max(jnp.abs(out_bf16 - ref)))

    # f32 bit-parity mode: tight tolerance against the f32 reference.
    out_f32 = conv_bn_relu(x, conv_w, gamma, beta,
                           stride=STRIDE, padding=PAD, dilation=DIL,
                           tile_m=128, compute_dtype=jnp.float32)
    out_f32 = jax.block_until_ready(out_f32)
    assert out_f32.shape == (N, COUT, H, W)
    assert jnp.allclose(out_f32, ref, atol=2e-4, rtol=2e-4), \
        float(jnp.max(jnp.abs(out_f32 - ref)))

    print("KERNEL_OK")
</pallas_src>

<mosaic_0001>
module attributes {stable_mosaic.version = 11 : i64} {
  func.func @_matmul_stats_kernel(%arg0: i32, %arg1: i32, %arg2: i32, %arg3: memref<128x48xbf16, #tpu.memory_space<vmem>>, %arg4: memref<48x128xbf16, #tpu.memory_space<vmem>>, %arg5: memref<128x128xbf16, #tpu.memory_space<vmem>>, %arg6: memref<8x128xf32, #tpu.memory_space<vmem>>, %arg7: memref<8x128xf32, #tpu.memory_space<vmem>>) attributes {dimension_semantics = [#tpu.dimension_semantics<parallel>, #tpu.dimension_semantics<parallel>, #tpu.dimension_semantics<arbitrary>], iteration_bounds = array<i64: 2, 1, 2>, scalar_prefetch = 0 : i64, scratch_operands = 0 : i64, tpu.core_type = #tpu.core_type<tc>, window_params = [{transform_indices = @transform_0, window_bounds = array<i64: 128, 48>}, {transform_indices = @transform_1, window_bounds = array<i64: 48, 128>}, {transform_indices = @transform_2, window_bounds = array<i64: 128, 128>}, {transform_indices = @transform_3, window_bounds = array<i64: 8, 128>}, {transform_indices = @transform_4, window_bounds = array<i64: 8, 128>}]} {
    %c0_i32 = arith.constant 0 : i32
    %0 = arith.cmpi eq, %arg2, %c0_i32 : i32
    %1 = arith.extui %0 : i1 to i32
    %c0_i32_0 = arith.constant 0 : i32
    %2 = arith.cmpi ne, %1, %c0_i32_0 : i32
    scf.if %2 {
      %cst_16 = arith.constant 0.000000e+00 : f32
      %21 = vector.broadcast %cst_16 : f32 to vector<8x128xf32>
      %c0_17 = arith.constant 0 : index
      %c0_18 = arith.constant 0 : index
      %22 = vector.load %arg6[%c0_17, %c0_18] : memref<8x128xf32, #tpu.memory_space<vmem>>, vector<8x128xf32>
      tpu.vector_store %arg6[%c0_17, %c0_18], %21 {strides = array<i32>} : memref<8x128xf32, #tpu.memory_space<vmem>>, vector<8x128xf32>,
      %cst_19 = arith.constant 0.000000e+00 : f32
      %23 = vector.broadcast %cst_19 : f32 to vector<8x128xf32>
      %c0_20 = arith.constant 0 : index
      %c0_21 = arith.constant 0 : index
      %24 = vector.load %arg7[%c0_20, %c0_21] : memref<8x128xf32, #tpu.memory_space<vmem>>, vector<8x128xf32>
      tpu.vector_store %arg7[%c0_20, %c0_21], %23 {strides = array<i32>} : memref<8x128xf32, #tpu.memory_space<vmem>>, vector<8x128xf32>,
    } else {
    }
    %c0 = arith.constant 0 : index
    %c0_1 = arith.constant 0 : index
    %3 = vector.load %arg3[%c0, %c0_1] : memref<128x48xbf16, #tpu.memory_space<vmem>>, vector<128x48xbf16>
    %c0_2 = arith.constant 0 : index
    %c0_3 = arith.constant 0 : index
    %4 = vector.load %arg4[%c0_2, %c0_3] : memref<48x128xbf16, #tpu.memory_space<vmem>>, vector<48x128xbf16>
    %cst = arith.constant dense<0.000000e+00> : vector<128x128xf32>
    %5 = tpu.matmul %3, %4, %cst {dimension_numbers = #tpu.dot_dimension_numbers<[1], [0], [0], [1], [0, 0, 1, 1], [], []>} : vector<128x48xbf16>, vector<48x128xbf16>, vector<128x128xf32> -> vector<128x128xf32>
    %6 = arith.truncf %5 : vector<128x128xf32> to vector<128x128xbf16>
    %c0_4 = arith.constant 0 : index
    %c0_5 = arith.constant 0 : index
    %7 = vector.load %arg5[%c0_4, %c0_5] : memref<128x128xbf16, #tpu.memory_space<vmem>>, vector<128x128xbf16>
    tpu.vector_store %arg5[%c0_4, %c0_5], %6 {strides = array<i32>} : memref<128x128xbf16, #tpu.memory_space<vmem>>, vector<128x128xbf16>,
    %c0_6 = arith.constant 0 : index
    %c0_7 = arith.constant 0 : index
    %8 = vector.load %arg6[%c0_6, %c0_7] : memref<8x128xf32, #tpu.memory_space<vmem>>, vector<8x128xf32>
    %cst_8 = arith.constant dense<0.000000e+00> : vector<128xf32>
    %9 = vector.multi_reduction <add>, %5, %cst_8 [0] : vector<128x128xf32> to vector<128xf32>
    %10 = vector.shape_cast %9 : vector<128xf32> to vector<1x128xf32>
    %11 = vector.broadcast %10 : vector<1x128xf32> to vector<8x128xf32>
    %12 = arith.addf %8, %11 : vector<8x128xf32>
    %c0_9 = arith.constant 0 : index
    %c0_10 = arith.constant 0 : index
    %13 = vector.load %arg6[%c0_9, %c0_10] : memref<8x128xf32, #tpu.memory_space<vmem>>, vector<8x128xf32>
    tpu.vector_store %arg6[%c0_9, %c0_10], %12 {strides = array<i32>} : memref<8x128xf32, #tpu.memory_space<vmem>>, vector<8x128xf32>,
    %c0_11 = arith.constant 0 : index
    %c0_12 = arith.constant 0 : index
    %14 = vector.load %arg7[%c0_11, %c0_12] : memref<8x128xf32, #tpu.memory_space<vmem>>, vector<8x128xf32>
    %15 = arith.mulf %5, %5 : vector<128x128xf32>
    %cst_13 = arith.constant dense<0.000000e+00> : vector<128xf32>
    %16 = vector.multi_reduction <add>, %15, %cst_13 [0] : vector<128x128xf32> to vector<128xf32>
    %17 = vector.shape_cast %16 : vector<128xf32> to vector<1x128xf32>
    %18 = vector.broadcast %17 : vector<1x128xf32> to vector<8x128xf32>
    %19 = arith.addf %14, %18 : vector<8x128xf32>
    %c0_14 = arith.constant 0 : index
    %c0_15 = arith.constant 0 : index
    %20 = vector.load %arg7[%c0_14, %c0_15] : memref<8x128xf32, #tpu.memory_space<vmem>>, vector<8x128xf32>
    tpu.vector_store %arg7[%c0_14, %c0_15], %19 {strides = array<i32>} : memref<8x128xf32, #tpu.memory_space<vmem>>, vector<8x128xf32>,
    return
  }
  func.func @transform_0(%arg0: i32, %arg1: i32, %arg2: i32) -> (i32, i32) {
    %c2_i32 = arith.constant 2 : i32
    %0 = arith.muli %arg0, %c2_i32 : i32
    %1 = arith.addi %0, %arg2 : i32
    %c0_i32 = arith.constant 0 : i32
    %c0_i32_0 = arith.constant 0 : i32
    return %1, %c0_i32 : i32, i32
  }
  func.func @transform_1(%arg0: i32, %arg1: i32, %arg2: i32) -> (i32, i32) {
    %c0_i32 = arith.constant 0 : i32
    %c0_i32_0 = arith.constant 0 : i32
    return %c0_i32, %arg1 : i32, i32
  }
  func.func @transform_2(%arg0: i32, %arg1: i32, %arg2: i32) -> (i32, i32) {
    %c2_i32 = arith.constant 2 : i32
    %0 = arith.muli %arg0, %c2_i32 : i32
    %1 = arith.addi %0, %arg2 : i32
    %c0_i32 = arith.constant 0 : i32
    return %1, %arg1 : i32, i32
  }
  func.func @transform_3(%arg0: i32, %arg1: i32, %arg2: i32) -> (i32, i32) {
    %c0_i32 = arith.constant 0 : i32
    return %arg0, %arg1 : i32, i32
  }
  func.func @transform_4(%arg0: i32, %arg1: i32, %arg2: i32) -> (i32, i32) {
    %c0_i32 = arith.constant 0 : i32
    return %arg0, %arg1 : i32, i32
  }
}

module attributes {stable_mosaic.version = 11 : i64} {
  func.func @_bn_relu_kernel(%arg0: i32, %arg1: memref<512x128xbf16, #tpu.memory_space<vmem>>, %arg2: memref<1x128xf32, #tpu.memory_space<vmem>>, %arg3: memref<1x128xf32, #tpu.memory_space<vmem>>, %arg4: memref<512x128xf32, #tpu.memory_space<vmem>>) attributes {dimension_semantics = [#tpu.dimension_semantics<parallel>], iteration_bounds = array<i64: 1>, scalar_prefetch = 0 : i64, scratch_operands = 0 : i64, tpu.core_type = #tpu.core_type<tc>, window_params = [{transform_indices = @transform_0, window_bounds = array<i64: 512, 128>}, {pipeline_mode = #tpu.pipeline_mode<synchronous>, transform_indices = @transform_1, window_bounds = array<i64: 1, 128>}, {pipeline_mode = #tpu.pipeline_mode<synchronous>, transform_indices = @transform_2, window_bounds = array<i64: 1, 128>}, {transform_indices = @transform_3, window_bounds = array<i64: 512, 128>}]} {
    %c0 = arith.constant 0 : index
    %c0_0 = arith.constant 0 : index
    %0 = vector.load %arg1[%c0, %c0_0] : memref<512x128xbf16, #tpu.memory_space<vmem>>, vector<512x128xbf16>
    %1 = arith.extf %0 : vector<512x128xbf16> to vector<512x128xf32>
    %c0_1 = arith.constant 0 : index
    %c0_2 = arith.constant 0 : index
    %2 = vector.load %arg2[%c0_1, %c0_2] : memref<1x128xf32, #tpu.memory_space<vmem>>, vector<1x128xf32>
    %3 = vector.broadcast %2 : vector<1x128xf32> to vector<512x128xf32>
    %4 = arith.mulf %1, %3 : vector<512x128xf32>
    %c0_3 = arith.constant 0 : index
    %c0_4 = arith.constant 0 : index
    %5 = vector.load %arg3[%c0_3, %c0_4] : memref<1x128xf32, #tpu.memory_space<vmem>>, vector<1x128xf32>
    %6 = vector.broadcast %5 : vector<1x128xf32> to vector<512x128xf32>
    %7 = arith.addf %4, %6 : vector<512x128xf32>
    %cst = arith.constant 0.000000e+00 : f32
    %8 = vector.broadcast %cst : f32 to vector<512x128xf32>
    %9 = arith.maximumf %7, %8 : vector<512x128xf32>
    %c0_5 = arith.constant 0 : index
    %c0_6 = arith.constant 0 : index
    %10 = vector.load %arg4[%c0_5, %c0_6] : memref<512x128xf32, #tpu.memory_space<vmem>>, vector<512x128xf32>
    tpu.vector_store %arg4[%c0_5, %c0_6], %9 {strides = array<i32>} : memref<512x128xf32, #tpu.memory_space<vmem>>, vector<512x128xf32>,
    return
  }
  func.func @transform_0(%arg0: i32) -> (i32, i32) {
    %c0_i32 = arith.constant 0 : i32
    %c0_i32_0 = arith.constant 0 : i32
    return %arg0, %c0_i32 : i32, i32
  }
  func.func @transform_1(%arg0: i32) -> (i32, i32) {
    %c0_i32 = arith.constant 0 : i32
    %c0_i32_0 = arith.constant 0 : i32
    %c0_i32_1 = arith.constant 0 : i32
    return %c0_i32, %c0_i32_0 : i32, i32
  }
  func.func @transform_2(%arg0: i32) -> (i32, i32) {
    %c0_i32 = arith.constant 0 : i32
    %c0_i32_0 = arith.constant 0 : i32
    %c0_i32_1 = arith.constant 0 : i32
    return %c0_i32, %c0_i32_0 : i32, i32
  }
  func.func @transform_3(%arg0: i32) -> (i32, i32) {
    %c0_i32 = arith.constant 0 : i32
    %c0_i32_0 = arith.constant 0 : i32
    return %arg0, %c0_i32 : i32, i32
  }
}

</mosaic_0001>

<llo_original>
// kernel: conv_bn_relu.2
$region0: #{conv_bn_relu.2}
  #allocation0 [shape = 'u32[]', space=smem, size = 0x4, offset = 0x4, fixed_abs, tag = 'smem constant byte address 0x4 - core index']
  #allocation1 [shape = 'u32[144,128]{1,0:T(1,128)}', space=vmem, size = 0x12000, scoped, tag = 'internal scratch']
  %s0 = inlined_call_operand.vmem [shape: bf16[512,48], index: 0, kind: input, shape index: {}]
  %s1 = inlined_call_operand.vmem [shape: bf16[48,128], index: 1, kind: input, shape index: {}]
  %s2 = inlined_call_operand.vmem [shape: bf16[512,128], index: 2, kind: output, shape index: {0}]
  %s3 = inlined_call_operand.vmem [shape: f32[16,128], index: 3, kind: output, shape index: {1}]
  %s4 = inlined_call_operand.vmem [shape: f32[16,128], index: 4, kind: output, shape index: {2}]
  %5 = xla_tuple %s2, %s3, %s4
  %s6 = sld [smem:[#allocation0]]
  $region61: #{conv_bn_relu.2} parent=0
    _
  %s8 = ssub.s32 1, %s6
  %s9 = scalar_select 0, %s8, %s6
  loop: start=0, step=1, limit=6
  $region2: #{conv_bn_relu.2} parent=0 // loop_pre_header
    _
  $region3: #{conv_bn_relu.2} parent=0 // loop_header
    %s11 = sphi 0, %s15
    %p12 = scmp.ge.s32.totalorder %s11, 6
    %s18 = sphi 0, %s37
    %s19 = sphi 0, %s33
    %s20 = sphi 0, %s29
    %s21 = sphi 0, %s18
    %s22 = sphi 0, %s19
    %s23 = sphi 0, %s20
    %s24 = sphi 0, %s21
    %s25 = sphi 0, %s22
    %s26 = sphi 0, %s23
    %s44 = sphi 0, %s46
    %s47 = sphi 0, %s44
    %s48 = sphi 0, %s47
    %s64 = sphi 0, %s48
    %s70 = sphi 0, %s72
    %s73 = sphi 0, %s70
    %s74 = sphi 0, %s73
    %s90 = sphi 0, %s74
    %s102 = sphi 0, %s104
    %s105 = sphi 0, %s102
    %s106 = sphi 0, %s105
    %s122 = sphi 0, %s106
    %s130 = sphi 0, %s132
    %s133 = sphi 0, %s130
    %s134 = sphi 0, %s133
    %s150 = sphi 0, %s134
    %s158 = sphi 0, %s160
    %s161 = sphi 0, %s158
    %s162 = sphi 0, %s161
    %s178 = sphi 0, %s162
  $region4: #{conv_bn_relu.2} parent=0 // loop_header_branch
    %14 = sbr.rel (%p12) target = $region8
  $region5: #{conv_bn_relu.2} parent=0 // loop_body
    %s16 = ssub.s32 %s11, 1
    %s17 = ssub.s32 %s11, 2
    %s27 = sadd.s32 1, %s20
    %p28 = scmp.ge.s32.totalorder %s27, 2
    %s29 = scalar_select %p28, 0, %s27
    %s30 = sadd.s32 1, %s19
    %s31 = scalar_select %p28, %s30, %s19
    %p32 = scmp.ge.s32.totalorder %s31, 1
    %s33 = scalar_select %p32, 0, %s31
    %s34 = sadd.s32 1, %s18
    %s35 = scalar_select %p32, %s34, %s18
    %p36 = scmp.ge.s32.totalorder %s35, 2
    %s37 = scalar_select %p36, 0, %s35
    %s38 = smul.u32 %s18, 2
    %s39 = sadd.s32 %s38, %s20
    %s40 = smul.u32 %s37, 2
    %s41 = sadd.s32 %s40, %s29
    %s42 = ssub.s32 %s39, %s41
    %p43 = scmp.eq.s32.totalorder %s42, 0
    %s45 = sadd.s32 %s44, 1
    %s46 = scalar_select %p43, %s44, %s45
    %p49 = pneg %p43
    %p50 = scmp.eq.s32.totalorder %s11, 3
    %p51 = por %p49, %p50
    %p52 = scmp.ne.s32.totalorder %s44, %s47
    %p53 = scmp.eq.s32.totalorder %s11, 0
    %p54 = por %p52, %p53
    %p55 = scmp.ne.s32.totalorder %s44, %s47
    %p56 = scmp.eq.s32.totalorder %s16, 3
    %p57 = por %p55, %p56
    %p58 = scmp.ne.s32.totalorder %s47, %s48
    %p59 = scmp.eq.s32.totalorder %s16, 0
    %p60 = por %p58, %p59
    %p61 = scmp.ne.s32.totalorder %s47, %s48
    %p62 = scmp.eq.s32.totalorder %s17, 3
    %p63 = por %p61, %p62
    %p65 = scmp.ne.s32.totalorder %s48, %s64
    %p66 = scmp.eq.s32.totalorder %s17, 0
    %p67 = por %p65, %p66
    %s68 = ssub.s32 %s19, %s33
    %p69 = scmp.eq.s32.totalorder %s68, 0
    %s71 = sadd.s32 %s70, 1
    %s72 = scalar_select %p69, %s70, %s71
    %p75 = pneg %p69
    %p76 = scmp.eq.s32.totalorder %s11, 3
    %p77 = por %p75, %p76
    %p78 = scmp.ne.s32.totalorder %s70, %s73
    %p79 = scmp.eq.s32.totalorder %s11, 0
    %p80 = por %p78, %p79
    %p81 = scmp.ne.s32.totalorder %s70, %s73
    %p82 = scmp.eq.s32.totalorder %s16, 3
    %p83 = por %p81, %p82
    %p84 = scmp.ne.s32.totalorder %s73, %s74
    %p85 = scmp.eq.s32.totalorder %s16, 0
    %p86 = por %p84, %p85
    %p87 = scmp.ne.s32.totalorder %s73, %s74
    %p88 = scmp.eq.s32.totalorder %s17, 3
    %p89 = por %p87, %p88
    %p91 = scmp.ne.s32.totalorder %s74, %s90
    %p92 = scmp.eq.s32.totalorder %s17, 0
    %p93 = por %p91, %p92
    %s94 = smul.u32 %s18, 2
    %s95 = sadd.s32 %s94, %s20
    %s96 = smul.u32 %s37, 2
    %s97 = sadd.s32 %s96, %s29
    %s98 = ssub.s32 %s95, %s97
    %s99 = ssub.s32 %s19, %s33
    %s100 = sor.u32 %s98, %s99
    %p101 = scmp.eq.s32.totalorder %s100, 0
    %s103 = sadd.s32 %s102, 1
    %s104 = scalar_select %p101, %s102, %s103
    %p107 = pneg %p101
    %p108 = scmp.eq.s32.totalorder %s11, 3
    %p109 = por %p107, %p108
    %p110 = scmp.ne.s32.totalorder %s102, %s105
    %p111 = scmp.eq.s32.totalorder %s11, 0
    %p112 = por %p110, %p111
    %p113 = scmp.ne.s32.totalorder %s102, %s105
    %p114 = scmp.eq.s32.totalorder %s16, 3
    %p115 = por %p113, %p114
    %p116 = scmp.ne.s32.totalorder %s105, %s106
    %p117 = scmp.eq.s32.totalorder %s16, 0
    %p118 = por %p116, %p117
    %p119 = scmp.ne.s32.totalorder %s105, %s106
    %p120 = scmp.eq.s32.totalorder %s17, 3
    %p121 = por %p119, %p120
    %p123 = scmp.ne.s32.totalorder %s106, %s122
    %p124 = scmp.eq.s32.totalorder %s17, 0
    %p125 = por %p123, %p124
    %s126 = ssub.s32 %s18, %s37
    %s127 = ssub.s32 %s19, %s33
    %s128 = sor.u32 %s126, %s127
    %p129 = scmp.eq.s32.totalorder %s128, 0
    %s131 = sadd.s32 %s130, 1
    %s132 = scalar_select %p129, %s130, %s131
    %p135 = pneg %p129
    %p136 = scmp.eq.s32.totalorder %s11, 3
    %p137 = por %p135, %p136
    %p138 = scmp.ne.s32.totalorder %s130, %s133
    %p139 = scmp.eq.s32.totalorder %s11, 0
    %p140 = por %p138, %p139
    %p141 = scmp.ne.s32.totalorder %s130, %s133
    %p142 = scmp.eq.s32.totalorder %s16, 3
    %p143 = por %p141, %p142
    %p144 = scmp.ne.s32.totalorder %s133, %s134
    %p145 = scmp.eq.s32.totalorder %s16, 0
    %p146 = por %p144, %p145
    %p147 = scmp.ne.s32.totalorder %s133, %s134
    %p148 = scmp.eq.s32.totalorder %s17, 3
    %p149 = por %p147, %p148
    %p151 = scmp.ne.s32.totalorder %s134, %s150
    %p152 = scmp.eq.s32.totalorder %s17, 0
    %p153 = por %p151, %p152
    %s154 = ssub.s32 %s18, %s37
    %s155 = ssub.s32 %s19, %s33
    %s156 = sor.u32 %s154, %s155
    %p157 = scmp.eq.s32.totalorder %s156, 0
    %s159 = sadd.s32 %s158, 1
    %s160 = scalar_select %p157, %s158, %s159
    %p163 = pneg %p157
    %p164 = scmp.eq.s32.totalorder %s11, 3
    %p165 = por %p163, %p164
    %p166 = scmp.ne.s32.totalorder %s158, %s161
    %p167 = scmp.eq.s32.totalorder %s11, 0
    %p168 = por %p166, %p167
    %p169 = scmp.ne.s32.totalorder %s158, %s161
    %p170 = scmp.eq.s32.totalorder %s16, 3
    %p171 = por %p169, %p170
    %p172 = scmp.ne.s32.totalorder %s161, %s162
    %p173 = scmp.eq.s32.totalorder %s16, 0
    %p174 = por %p172, %p173
    %p175 = scmp.ne.s32.totalorder %s161, %s162
    %p176 = scmp.eq.s32.totalorder %s17, 3
    %p177 = por %p175, %p176
    %p179 = scmp.ne.s32.totalorder %s162, %s178
    %p180 = scmp.eq.s32.totalorder %s17, 0
    %p181 = por %p179, %p180
    %p182 = scmp.le.s32.totalorder 1, %s11
    %p183 = scmp.lt.s32.totalorder %s11, 5
    %p184 = pnand %p182, %p183
    %p185 = pneg %p184
    // Predicated region
    $region9: #{conv_bn_relu.2} parent=5 // pred_check
      _
    $region10: #{conv_bn_relu.2} parent=5 // pred_check_branch
      %187 = sbr.rel (%p184) target = $region12
    $region11: #{conv_bn_relu.2} parent=5 // pred_region
      %s188 = ssub.s32 %s11, 1
      // Predicated region
      $region13: #{conv_bn_relu.2} parent=11 // pred_check
        %p189 = pneg %p86
      $region14: #{conv_bn_relu.2} parent=11 // pred_check_branch
        %191 = sbr.rel (%p189) target = $region16
      $region15: #{conv_bn_relu.2} parent=11 // pred_region
        %p192 = scmp.lt.s32.totalorder %s22, 0
        %s193 = scalar_select %p192, %s22, 0
        %s194 = smul.addr %s193, 4
        %s195 = scalar_lea.vmem %s1, %s194
      $region16: #{conv_bn_relu.2} parent=11 // pred_fallthru
        _
    $region12: #{conv_bn_relu.2} parent=5 // pred_fallthru
      _
    %p196 = scmp.lt.s32.totalorder %s11, 4
    // Predicated region
    $region17: #{conv_bn_relu.2} parent=5 // pred_check
      %p197 = pneg %p196
    $region18: #{conv_bn_relu.2} parent=5 // pred_check_branch
      %199 = sbr.rel (%p197) target = $region20
    $region19: #{conv_bn_relu.2} parent=5 // pred_region
      // Predicated region
      $region21: #{conv_bn_relu.2} parent=19 // pred_check
        %p200 = pneg %p54
      $region22: #{conv_bn_relu.2} parent=19 // pred_check_branch
        %202 = sbr.rel (%p200) target = $region24
      $region23: #{conv_bn_relu.2} parent=19 // pred_region
        %s203 = smul.u32 %s18, 2
        %s204 = sadd.s32 %s203, %s20
        %s205 = smul.u32 16, %s204
        %p206 = scmp.lt.s32.totalorder %s205, 63
        %s207 = scalar_select %p206, %s205, 63
        %s208 = smul.addr %s207, 4
        %s209 = scalar_lea.vmem %s0, %s208
        %s210 = smul.u32 %s18, 2
        %s211 = sadd.s32 %s210, %s20
        %s212 = smul.u32 16, %s211
      $region24: #{conv_bn_relu.2} parent=19 // pred_fallthru
        _
    $region20: #{conv_bn_relu.2} parent=5 // pred_fallthru
      _
    %p213 = scmp.le.s32.totalorder 1, %s11
    %p214 = scmp.lt.s32.totalorder %s11, 5
    %p215 = pnand %p213, %p214
    %p216 = pneg %p215
    // Predicated region
    $region25: #{conv_bn_relu.2} parent=5 // pred_check
      _
    $region26: #{conv_bn_relu.2} parent=5 // pred_check_branch
      %218 = sbr.rel (%p215) target = $region28
    $region27: #{conv_bn_relu.2} parent=5 // pred_region
      %s219 = ssub.s32 %s11, 1
      %s220 = smul.u32 %s21, 2
      %s221 = sadd.s32 %s220, %s23
      %s222 = smul.u32 16, %s221
      %p223 = scmp.lt.s32.totalorder %s222, 63
      %s224 = scalar_select %p223, %s222, 63
      %s225 = smul.addr %s224, 4
      %s226 = scalar_lea.vmem %s0, %s225
      %p227 = pneg %p60
      %p228 = pneg %p57
      %p229 = scmp.lt.s32.totalorder %s22, 0
      %s230 = scalar_select %p229, %s22, 0
      %s231 = smul.addr %s230, 4
      %s232 = scalar_lea.vmem %s1, %s231
      %p233 = pneg %p86
      %p234 = pneg %p83
      %p235 = pneg %p118
      %p236 = pneg %p115
      %s237 = smul.u32 %s21, 2
      %s238 = sadd.s32 %s237, %s23
      %s239 = smul.u32 16, %s238
      %p240 = scmp.lt.s32.totalorder %s239, 63
      %s241 = scalar_select %p240, %s239, 63
      %p242 = scmp.lt.s32.totalorder %s22, 0
      %s243 = scalar_select %p242, %s22, 0
      %s244 = sadd.s32 %s243, %s241
      %s245 = smul.addr %s244, 4
      %s246 = scalar_lea.vmem %s2, %s245
      %p247 = pneg %p146
      %p248 = pneg %p143
      %p249 = scmp.lt.s32.totalorder %s21, 1
      %s250 = scalar_select %p249, %s21, 1
      %p251 = scmp.lt.s32.totalorder %s22, 0
      %s252 = scalar_select %p251, %s22, 0
      %s253 = sadd.s32 %s252, %s250
      %s254 = smul.addr %s253, 8
      %s255 = scalar_lea.vmem %s3, %s254
      %p256 = pneg %p174
      %p257 = pneg %p171
      %p258 = scmp.lt.s32.totalorder %s21, 1
      %s259 = scalar_select %p258, %s21, 1
      %p260 = scmp.lt.s32.totalorder %s22, 0
      %s261 = scalar_select %p260, %s22, 0
      %s262 = sadd.s32 %s261, %s259
      %s263 = smul.addr %s262, 8
      %s264 = scalar_lea.vmem %s4, %s263
      %s265 = smul.u32 %s21, 2
      %s266 = sadd.s32 %s265, %s23
      %s267 = smul.u32 16, %s266
      %p268 = scmp.lt.s32.totalorder %s267, 63
      %s269 = scalar_select %p268, %s267, 63
      %s270 = smul.addr %s269, 4
      %s271 = scalar_lea.vmem %s0, %s270
      %s272 = smul.u32 %s21, 2
      %s273 = sadd.s32 %s272, %s23
      %s274 = smul.u32 16, %s273
      %p275 = scmp.lt.s32.totalorder %s22, 0
      %s276 = scalar_select %p275, %s22, 0
      %s277 = smul.addr %s276, 4
      %s278 = scalar_lea.vmem %s1, %s277
      %s279 = smul.u32 %s21, 2
      %s280 = sadd.s32 %s279, %s23
      %s281 = smul.u32 16, %s280
      %p282 = scmp.lt.s32.totalorder %s281, 63
      %s283 = scalar_select %p282, %s281, 63
      %p284 = scmp.lt.s32.totalorder %s22, 0
      %s285 = scalar_select %p284, %s22, 0
      %s286 = sadd.s32 %s285, %s283
      %s287 = smul.addr %s286, 4
      %s288 = scalar_lea.vmem %s2, %s287
      %s289 = smul.u32 %s21, 2
      %s290 = sadd.s32 %s289, %s23
      %s291 = smul.u32 16, %s290
      %p292 = scmp.lt.s32.totalorder %s21, 1
      %s293 = scalar_select %p292, %s21, 1
      %p294 = scmp.lt.s32.totalorder %s22, 0
      %s295 = scalar_select %p294, %s22, 0
      %s296 = sadd.s32 %s295, %s293
      %s297 = smul.addr %s296, 8
      %s298 = scalar_lea.vmem %s3, %s297
      %p299 = scmp.lt.s32.totalorder %s21, 1
      %s300 = scalar_select %p299, %s21, 1
      %p301 = scmp.lt.s32.totalorder %s22, 0
      %s302 = scalar_select %p301, %s22, 0
      %s303 = sadd.s32 %s302, %s300
      %s304 = smul.addr %s303, 8
      %s305 = scalar_lea.vmem %s4, %s304
      %p307 = scmp.eq.s32.totalorder %s23, 0
      // Predicated region
      $region29: #{conv_bn_relu.2} parent=27 // pred_check
        %p308 = pneg %p307
      $region30: #{conv_bn_relu.2} parent=27 // pred_check_branch
        %310 = sbr.rel (%p308) target = $region32
      $region31: #{conv_bn_relu.2} parent=27 // pred_region
        %311 = vst [vmem:[%s298] sm:$0xff] 0.0
        %312 = vst [vmem:[%s305] sm:$0xff] 0.0
      $region32: #{conv_bn_relu.2} parent=27 // pred_fallthru
        _
      %v313 = vld [vmem:[%s271] sm:$0xf]
      %v314 = vld [vmem:[%s271 + $0x4] sm:$0xf]
      %v315 = vld [vmem:[%s271 + $0x8] sm:$0xf]
      %v316 = vld [vmem:[%s271 + $0xc] sm:$0xf]
      %v317 = vld [vmem:[%s271 + $0x10] sm:$0xf]
      %v318 = vld [vmem:[%s271 + $0x14] sm:$0xf]
      %v319 = vld [vmem:[%s271 + $0x18] sm:$0xf]
      %v320 = vld [vmem:[%s271 + $0x1c] sm:$0xf]
      %v321 = vld [vmem:[%s271 + $0x20] sm:$0xf]
      %v322 = vld [vmem:[%s271 + $0x24] sm:$0xf]
      %v323 = vld [vmem:[%s271 + $0x28] sm:$0xf]
      %v324 = vld [vmem:[%s271 + $0x2c] sm:$0xf]
      %v325 = vld [vmem:[%s271 + $0x30] sm:$0xf]
      %v326 = vld [vmem:[%s271 + $0x34] sm:$0xf]
      %v327 = vld [vmem:[%s271 + $0x38] sm:$0xf]
      %v328 = vld [vmem:[%s271 + $0x3c] sm:$0xf]
      %v329 = vld [vmem:[%s278] sm:$0xf]
      %v330 = vld [vmem:[%s278 + $0x4] sm:$0xf]
      %v331 = vld [vmem:[%s278 + $0x8] sm:$0xf]
      %v332 = vld [vmem:[%s278 + $0xc] sm:$0xf]
      %v333 = vld [vmem:[%s278 + $0x10] sm:$0xf]
      %v334 = vld [vmem:[%s278 + $0x14] sm:$0xf]
      %v351 = vunpack.c.l.b16 %v313
      %v352 = vunpack.c.l.b16 %v314
      %v353 = vunpack.c.l.b16 %v315
      %v354 = vunpack.c.l.b16 %v316
      %v355 = vunpack.c.l.b16 %v317
      %v356 = vunpack.c.l.b16 %v318
      %v357 = vunpack.c.l.b16 %v319
      %v358 = vunpack.c.l.b16 %v320
      %v359 = vunpack.c.l.b16 %v321
      %v360 = vunpack.c.l.b16 %v322
      %v361 = vunpack.c.l.b16 %v323
      %v362 = vunpack.c.l.b16 %v324
      %v363 = vunpack.c.l.b16 %v325
      %v364 = vunpack.c.l.b16 %v326
      %v365 = vunpack.c.l.b16 %v327
      %v366 = vunpack.c.l.b16 %v328
      %v367 = vpack.c.b16 %v352, %v351
      %v368 = vpack.c.b16 %v354, %v353
      %v369 = vpack.c.b16 %v356, %v355
      %v370 = vpack.c.b16 %v358, %v357
      %v371 = vpack.c.b16 %v360, %v359
      %v372 = vpack.c.b16 %v362, %v361
      %v373 = vpack.c.b16 %v364, %v363
      %v374 = vpack.c.b16 %v366, %v365
      %v381 = vunpack.c.l.b16 %v329
      %v382 = vunpack.c.l.b16 %v330
      %v383 = vunpack.c.l.b16 %v331
      %v384 = vunpack.c.l.b16 %v332
      %v385 = vunpack.c.l.b16 %v333
      %v386 = vunpack.c.l.b16 %v334
      %v387 = vpack.c.b16 %v382, %v381
      %v388 = vpack.c.b16 %v384, %v383
      %v389 = vpack.c.b16 %v386, %v385
      %vm393 = vcmask 392192
      %v395 = vsel %vm393, %v367, 0
      %v398 = vsel %vm393, %v368, 0
      %v401 = vsel %vm393, %v369, 0
      %v404 = vsel %vm393, %v370, 0
      %v407 = vsel %vm393, %v371, 0
      %v410 = vsel %vm393, %v372, 0
      %v413 = vsel %vm393, %v373, 0
      %v416 = vsel %vm393, %v374, 0
      %418 = vmatprep.subr.bf16.mxu0 0
      %419 = vmatpush1.bf16.msra.mxu0 %v387
      %420 = vmatprep.subr.bf16.mxu0 0
      %421 = vmatpush1.bf16.msra.mxu0 %v388
      %422 = vmatprep.subr.bf16.mxu0 0
      %423 = vmatpush1.bf16.msra.mxu0 %v389
      %424 = vmatprep.subr.bf16.mxu0 0
      %425 = vmatpush1.bf16.msra.mxu0 0
      %426 = vmatprep.subr.bf16.mxu0 0
      %427 = vmatpush1.bf16.msra.mxu0 0
      %428 = vmatprep.subr.bf16.mxu0 0
      %429 = vmatpush1.bf16.msra.mxu0 0
      %430 = vmatprep.subr.bf16.mxu0 0
      %431 = vmatpush1.bf16.msra.mxu0 0
      %432 = vmatprep.subr.bf16.mxu0 0
      %433 = vmatpush1.bf16.msra.mxu0 0
      %434 = vmatprep.subr.bf16.mxu0 0
      %435 = vmatpush1.bf16.msra.mxu0 0
      %436 = vmatprep.subr.bf16.mxu0 0
      %437 = vmatpush1.bf16.msra.mxu0 0
      %438 = vmatprep.subr.bf16.mxu0 0
      %439 = vmatpush1.bf16.msra.mxu0 0
      %440 = vmatprep.subr.bf16.mxu0 0
      %441 = vmatpush1.bf16.msra.mxu0 0
      %442 = vmatprep.subr.bf16.mxu0 0
      %443 = vmatpush1.bf16.msra.mxu0 0
      %444 = vmatprep.subr.bf16.mxu0 0
      %445 = vmatpush1.bf16.msra.mxu0 0
      %446 = vmatprep.subr.bf16.mxu0 0
      %447 = vmatpush1.bf16.msra.mxu0 0
      %448 = vmatprep.subr.bf16.mxu0 0
      %449 = vmatpush1.bf16.msra.mxu0 0
      %450 = vmatprep.mubr.bf16.mxu0 0
      %451 = vmatmul.mubr.bf16.gmra.mrb[0].mxu0 %v395
      %v452 = vpop.f32.mrb[0].mxu0
      %v453 = vadd.f32 0.0, %v452
      %v454 = vpop.f32.mrb[0].mxu0
      %v455 = vpop.f32.mrb[0].mxu0
      %v456 = vadd.f32 0.0, %v455
      %v457 = vpop.f32.mrb[0].mxu0
      %458 = vmatprep.mubr.bf16.mxu0 0
      %459 = vmatmul.mubr.bf16.gmra.mrb[0].mxu0 %v398
      %v460 = vpop.f32.mrb[0].mxu0
      %v461 = vadd.f32 0.0, %v460
      %v462 = vpop.f32.mrb[0].mxu0
      %v463 = vpop.f32.mrb[0].mxu0
      %v464 = vadd.f32 0.0, %v463
      %v465 = vpop.f32.mrb[0].mxu0
      %466 = vmatprep.mubr.bf16.mxu0 0
      %467 = vmatmul.mubr.bf16.gmra.mrb[0].mxu0 %v401
      %v468 = vpop.f32.mrb[0].mxu0
      %v469 = vadd.f32 0.0, %v468
      %v470 = vpop.f32.mrb[0].mxu0
      %v471 = vpop.f32.mrb[0].mxu0
      %v472 = vadd.f32 0.0, %v471
      %v473 = vpop.f32.mrb[0].mxu0
      %474 = vmatprep.mubr.bf16.mxu0 0
      %475 = vmatmul.mubr.bf16.gmra.mrb[0].mxu0 %v404
      %v476 = vpop.f32.mrb[0].mxu0
      %v477 = vadd.f32 0.0, %v476
      %v478 = vpop.f32.mrb[0].mxu0
      %v479 = vpop.f32.mrb[0].mxu0
      %v480 = vadd.f32 0.0, %v479
      %v481 = vpop.f32.mrb[0].mxu0
      %482 = vmatprep.mubr.bf16.mxu0 0
      %483 = vmatmul.mubr.bf16.gmra.mrb[0].mxu0 %v407
      %v484 = vpop.f32.mrb[0].mxu0
      %v485 = vadd.f32 0.0, %v484
      %v486 = vpop.f32.mrb[0].mxu0
      %v487 = vpop.f32.mrb[0].mxu0
      %v488 = vadd.f32 0.0, %v487
      %v489 = vpop.f32.mrb[0].mxu0
      %490 = vmatprep.mubr.bf16.mxu0 0
      %491 = vmatmul.mubr.bf16.gmra.mrb[0].mxu0 %v410
      %v492 = vpop.f32.mrb[0].mxu0
      %v493 = vadd.f32 0.0, %v492
      %v494 = vpop.f32.mrb[0].mxu0
      %v495 = vpop.f32.mrb[0].mxu0
      %v496 = vadd.f32 0.0, %v495
      %v497 = vpop.f32.mrb[0].mxu0
      %498 = vmatprep.mubr.bf16.mxu0 0
      %499 = vmatmul.mubr.bf16.gmra.mrb[0].mxu0 %v413
      %v500 = vpop.f32.mrb[0].mxu0
      %v501 = vadd.f32 0.0, %v500
      %v502 = vpop.f32.mrb[0].mxu0
      %v503 = vpop.f32.mrb[0].mxu0
      %v504 = vadd.f32 0.0, %v503
      %v505 = vpop.f32.mrb[0].mxu0
      %506 = vmatprep.mubr.bf16.mxu0 0
      %507 = vmatmul.mubr.bf16.gmra.mrb[0].mxu0 %v416
      %v508 = vpop.f32.mrb[0].mxu0
      %v509 = vadd.f32 0.0, %v508
      %v510 = vpop.f32.mrb[0].mxu0
      %v511 = vpop.f32.mrb[0].mxu0
      %v512 = vadd.f32 0.0, %v511
      %v513 = vpop.f32.mrb[0].mxu0
      %514 = vdwg.mxu0
      %v515 = vpack.c.bf16 %v456, %v453
      %v516 = vpack.c.bf16 %v464, %v461
      %v517 = vpack.c.bf16 %v472, %v469
      %v518 = vpack.c.bf16 %v480, %v477
      %v519 = vpack.c.bf16 %v488, %v485
      %v520 = vpack.c.bf16 %v496, %v493
      %v521 = vpack.c.bf16 %v504, %v501
      %v522 = vpack.c.bf16 %v512, %v509
      %v531 = vunpack.c.l.b16 %v515
      %v532 = vunpack.c.h.b16 %v515
      %v533 = vunpack.c.l.b16 %v516
      %v534 = vunpack.c.h.b16 %v516
      %v535 = vunpack.c.l.b16 %v517
      %v536 = vunpack.c.h.b16 %v517
      %v537 = vunpack.c.l.b16 %v518
      %v538 = vunpack.c.h.b16 %v518
      %v539 = vunpack.c.l.b16 %v519
      %v540 = vunpack.c.h.b16 %v519
      %v541 = vunpack.c.l.b16 %v520
      %v542 = vunpack.c.h.b16 %v520
      %v543 = vunpack.c.l.b16 %v521
      %v544 = vunpack.c.h.b16 %v521
      %v545 = vunpack.c.l.b16 %v522
      %v546 = vunpack.c.h.b16 %v522
      %v547 = vpack.c.b16 %v531, %v531
      %v548 = vpack.c.b16 %v532, %v532
      %v549 = vpack.c.b16 %v533, %v533
      %v550 = vpack.c.b16 %v534, %v534
      %v551 = vpack.c.b16 %v535, %v535
      %v552 = vpack.c.b16 %v536, %v536
      %v553 = vpack.c.b16 %v537, %v537
      %v554 = vpack.c.b16 %v538, %v538
      %v555 = vpack.c.b16 %v539, %v539
      %v556 = vpack.c.b16 %v540, %v540
      %v557 = vpack.c.b16 %v541, %v541
      %v558 = vpack.c.b16 %v542, %v542
      %v559 = vpack.c.b16 %v543, %v543
      %v560 = vpack.c.b16 %v544, %v544
      %v561 = vpack.c.b16 %v545, %v545
      %v562 = vpack.c.b16 %v546, %v546
      %579 = vst [vmem:[%s288] sm:$0xf] %v547
      %580 = vst [vmem:[%s288 + $0x4] sm:$0xf] %v548
      %581 = vst [vmem:[%s288 + $0x8] sm:$0xf] %v549
      %582 = vst [vmem:[%s288 + $0xc] sm:$0xf] %v550
      %583 = vst [vmem:[%s288 + $0x10] sm:$0xf] %v551
      %584 = vst [vmem:[%s288 + $0x14] sm:$0xf] %v552
      %585 = vst [vmem:[%s288 + $0x18] sm:$0xf] %v553
      %586 = vst [vmem:[%s288 + $0x1c] sm:$0xf] %v554
      %587 = vst [vmem:[%s288 + $0x20] sm:$0xf] %v555
      %588 = vst [vmem:[%s288 + $0x24] sm:$0xf] %v556
      %589 = vst [vmem:[%s288 + $0x28] sm:$0xf] %v557
      %590 = vst [vmem:[%s288 + $0x2c] sm:$0xf] %v558
      %591 = vst [vmem:[%s288 + $0x30] sm:$0xf] %v559
      %592 = vst [vmem:[%s288 + $0x34] sm:$0xf] %v560
      %593 = vst [vmem:[%s288 + $0x38] sm:$0xf] %v561
      %594 = vst [vmem:[%s288 + $0x3c] sm:$0xf] %v562
      %v595 = vld [vmem:[%s298] sm:$0xff]
      %v596 = vadd.f32 %v453, %v456
      %v597 = vadd.f32 %v596, %v461
      %v598 = vadd.f32 %v597, %v464
      %v599 = vadd.f32 %v598, %v469
      %v600 = vadd.f32 %v599, %v472
      %v601 = vadd.f32 %v600, %v477
      %v602 = vadd.f32 %v601, %v480
      %v603 = vadd.f32 %v602, %v485
      %v604 = vadd.f32 %v603, %v488
      %v605 = vadd.f32 %v604, %v493
      %v606 = vadd.f32 %v605, %v496
      %v607 = vadd.f32 %v606, %v501
      %v608 = vadd.f32 %v607, %v504
      %v609 = vadd.f32 %v608, %v509
      %v610 = vadd.f32 %v609, %v512
      %v611 = vrot.slane %v610, 4
      %v612 = vadd.f32 %v610, %v611
      %v613 = vrot.slane %v612, 2
      %v614 = vadd.f32 %v612, %v613
      %v615 = vrot.slane %v614, 1
      %v616 = vadd.f32 %v614, %v615
      %v617 = vadd.f32 %v595, %v616
      %618 = vst [vmem:[%s298] sm:$0xff] %v617
      %v619 = vld [vmem:[%s305] sm:$0xff]
      %v620 = vmul.f32 %v453, %v453
      %v621 = vmul.f32 %v456, %v456
      %v622 = vmul.f32 %v461, %v461
      %v623 = vmul.f32 %v464, %v464
      %v624 = vmul.f32 %v469, %v469
      %v625 = vmul.f32 %v472, %v472
      %v626 = vmul.f32 %v477, %v477
      %v627 = vmul.f32 %v480, %v480
      %v628 = vmul.f32 %v485, %v485
      %v629 = vmul.f32 %v488, %v488
      %v630 = vmul.f32 %v493, %v493
      %v631 = vmul.f32 %v496, %v496
      %v632 = vmul.f32 %v501, %v501
      %v633 = vmul.f32 %v504, %v504
      %v634 = vmul.f32 %v509, %v509
      %v635 = vmul.f32 %v512, %v512
      %v636 = vadd.f32 %v620, %v621
      %v637 = vadd.f32 %v636, %v622
      %v638 = vadd.f32 %v637, %v623
      %v639 = vadd.f32 %v638, %v624
      %v640 = vadd.f32 %v639, %v625
      %v641 = vadd.f32 %v640, %v626
      %v642 = vadd.f32 %v641, %v627
      %v643 = vadd.f32 %v642, %v628
      %v644 = vadd.f32 %v643, %v629
      %v645 = vadd.f32 %v644, %v630
      %v646 = vadd.f32 %v645, %v631
      %v647 = vadd.f32 %v646, %v632
      %v648 = vadd.f32 %v647, %v633
      %v649 = vadd.f32 %v648, %v634
      %v650 = vadd.f32 %v649, %v635
      %v651 = vrot.slane %v650, 4
      %v652 = vadd.f32 %v650, %v651
      %v653 = vrot.slane %v652, 2
      %v654 = vadd.f32 %v652, %v653
      %v655 = vrot.slane %v654, 1
      %v656 = vadd.f32 %v654, %v655
      %v657 = vadd.f32 %v619, %v656
      %658 = vst [vmem:[%s305] sm:$0xff] %v657
      %s659 = smul.u32 %s21, 2
      %s660 = sadd.s32 %s659, %s23
      %s661 = smul.u32 16, %s660
      %p662 = scmp.lt.s32.totalorder %s661, 63
      %s663 = scalar_select %p662, %s661, 63
      %p664 = scmp.lt.s32.totalorder %s22, 0
      %s665 = scalar_select %p664, %s22, 0
      %s666 = sadd.s32 %s665, %s663
      %s667 = smul.addr %s666, 4
      %s668 = scalar_lea.vmem %s2, %s667
      %p669 = scmp.lt.s32.totalorder %s21, 1
      %s670 = scalar_select %p669, %s21, 1
      %p671 = scmp.lt.s32.totalorder %s22, 0
      %s672 = scalar_select %p671, %s22, 0
      %s673 = sadd.s32 %s672, %s670
      %s674 = smul.addr %s673, 8
      %s675 = scalar_lea.vmem %s3, %s674
      %p676 = scmp.lt.s32.totalorder %s21, 1
      %s677 = scalar_select %p676, %s21, 1
      %p678 = scmp.lt.s32.totalorder %s22, 0
      %s679 = scalar_select %p678, %s22, 0
      %s680 = sadd.s32 %s679, %s677
      %s681 = smul.addr %s680, 8
      %s682 = scalar_lea.vmem %s4, %s681
      // Predicated region
      $region33: #{conv_bn_relu.2} parent=27 // pred_check
        %p683 = pneg %p115
      $region34: #{conv_bn_relu.2} parent=27 // pred_check_branch
        %685 = sbr.rel (%p683) target = $region36
      $region35: #{conv_bn_relu.2} parent=27 // pred_region
        %s686 = smul.u32 %s21, 2
        %s687 = sadd.s32 %s686, %s23
        %s688 = smul.u32 16, %s687
      $region36: #{conv_bn_relu.2} parent=27 // pred_fallthru
        _
      // Predicated region
      $region37: #{conv_bn_relu.2} parent=27 // pred_check
        %p689 = pneg %p143
      $region38: #{conv_bn_relu.2} parent=27 // pred_check_branch
        %691 = sbr.rel (%p689) target = $region40
      $region39: #{conv_bn_relu.2} parent=27 // pred_region
        _
      $region40: #{conv_bn_relu.2} parent=27 // pred_fallthru
        _
      // Predicated region
      $region41: #{conv_bn_relu.2} parent=27 // pred_check
        %p692 = pneg %p171
      $region42: #{conv_bn_relu.2} parent=27 // pred_check_branch
        %694 = sbr.rel (%p692) target = $region44
      $region43: #{conv_bn_relu.2} parent=27 // pred_region
        _
      $region44: #{conv_bn_relu.2} parent=27 // pred_fallthru
        _
    $region28: #{conv_bn_relu.2} parent=5 // pred_fallthru
      _
    %p695 = scmp.le.s32.totalorder 2, %s11
    // Predicated region
    $region45: #{conv_bn_relu.2} parent=5 // pred_check
      %p696 = pneg %p695
    $region46: #{conv_bn_relu.2} parent=5 // pred_check_branch
      %698 = sbr.rel (%p696) target = $region48
    $region47: #{conv_bn_relu.2} parent=5 // pred_region
      %s699 = ssub.s32 %s11, 2
      // Predicated region
      $region49: #{conv_bn_relu.2} parent=47 // pred_check
        %p700 = pneg %p121
      $region50: #{conv_bn_relu.2} parent=47 // pred_check_branch
        %702 = sbr.rel (%p700) target = $region52
      $region51: #{conv_bn_relu.2} parent=47 // pred_region
        %s703 = smul.u32 %s24, 2
        %s704 = sadd.s32 %s703, %s26
        %s705 = smul.u32 16, %s704
        %p706 = scmp.lt.s32.totalorder %s705, 63
        %s707 = scalar_select %p706, %s705, 63
        %p708 = scmp.lt.s32.totalorder %s25, 0
        %s709 = scalar_select %p708, %s25, 0
        %s710 = sadd.s32 %s709, %s707
        %s711 = smul.addr %s710, 4
        %s712 = scalar_lea.vmem %s2, %s711
      $region52: #{conv_bn_relu.2} parent=47 // pred_fallthru
        _
      // Predicated region
      $region53: #{conv_bn_relu.2} parent=47 // pred_check
        %p713 = pneg %p149
      $region54: #{conv_bn_relu.2} parent=47 // pred_check_branch
        %715 = sbr.rel (%p713) target = $region56
      $region55: #{conv_bn_relu.2} parent=47 // pred_region
        %p716 = scmp.lt.s32.totalorder %s24, 1
        %s717 = scalar_select %p716, %s24, 1
        %p718 = scmp.lt.s32.totalorder %s25, 0
        %s719 = scalar_select %p718, %s25, 0
        %s720 = sadd.s32 %s719, %s717
        %s721 = smul.addr %s720, 8
        %s722 = scalar_lea.vmem %s3, %s721
      $region56: #{conv_bn_relu.2} parent=47 // pred_fallthru
        _
      // Predicated region
      $region57: #{conv_bn_relu.2} parent=47 // pred_check
        %p723 = pneg %p177
      $region58: #{conv_bn_relu.2} parent=47 // pred_check_branch
        %725 = sbr.rel (%p723) target = $region60
      $region59: #{conv_bn_relu.2} parent=47 // pred_region
        %p726 = scmp.lt.s32.totalorder %s24, 1
        %s727 = scalar_select %p726, %s24, 1
        %p728 = scmp.lt.s32.totalorder %s25, 0
        %s729 = scalar_select %p728, %s25, 0
        %s730 = sadd.s32 %s729, %s727
        %s731 = smul.addr %s730, 8
        %s732 = scalar_lea.vmem %s4, %s731
      $region60: #{conv_bn_relu.2} parent=47 // pred_fallthru
        _
    $region48: #{conv_bn_relu.2} parent=5 // pred_fallthru
      _
  $region6: #{conv_bn_relu.2} parent=0 // loop_footer
    %s15 = sadd.s32 1, %s11
  $region7: #{conv_bn_relu.2} parent=0 // loop_footer_branch
    %10 = sbr.rel target = $region3
  $region8: #{conv_bn_relu.2} parent=0 // loop_exit
    _

// kernel: conv_bn_relu.3
$region0: #{conv_bn_relu.3}
  #allocation0 [shape = 'u32[]', space=smem, size = 0x4, offset = 0x4, fixed_abs, tag = 'smem constant byte address 0x4 - core index']
  #allocation1 [shape = 'u32[144,128]{1,0:T(1,128)}', space=vmem, size = 0x12000, scoped, tag = 'internal scratch']
  %s0 = inlined_call_operand.vmem [shape: bf16[512,128], index: 0, kind: input, shape index: {}]
  %s1 = inlined_call_operand.vmem [shape: f32[1,128], index: 1, kind: input, shape index: {}]
  %s2 = inlined_call_operand.vmem [shape: f32[1,128], index: 2, kind: input, shape index: {}]
  %s3 = inlined_call_operand.vmem [shape: f32[512,128], index: 3, kind: output, shape index: {}]
  %s4 = sld [smem:[#allocation0]]
  $region22: #{conv_bn_relu.3} parent=0
    _
  %s6 = ssub.s32 1, %s4
  %s7 = scalar_select 0, %s6, %s4
  // Predicated region
  $region2: #{conv_bn_relu.3} parent=0 // pred_check
    _
  $region3: #{conv_bn_relu.3} parent=0 // pred_check_branch
    %9 = sbr.rel (0) target = $region5
  $region4: #{conv_bn_relu.3} parent=0 // pred_region
    _
  $region5: #{conv_bn_relu.3} parent=0 // pred_fallthru
    _
  // Predicated region
  $region6: #{conv_bn_relu.3} parent=0 // pred_check
    _
  $region7: #{conv_bn_relu.3} parent=0 // pred_check_branch
    %11 = sbr.rel (0) target = $region9
  $region8: #{conv_bn_relu.3} parent=0 // pred_region
    _
  $region9: #{conv_bn_relu.3} parent=0 // pred_fallthru
    _
  // Predicated region
  $region10: #{conv_bn_relu.3} parent=0 // pred_check
    _
  $region11: #{conv_bn_relu.3} parent=0 // pred_check_branch
    %13 = sbr.rel (0) target = $region13
  $region12: #{conv_bn_relu.3} parent=0 // pred_region
    _
  $region13: #{conv_bn_relu.3} parent=0 // pred_fallthru
    _
  %v14 = vld [vmem:[%s0] sm:$0xf]
  %v15 = vld [vmem:[%s0 + $0x4] sm:$0xf]
  %v16 = vld [vmem:[%s0 + $0x8] sm:$0xf]
  %v17 = vld [vmem:[%s0 + $0xc] sm:$0xf]
  %v18 = vld [vmem:[%s0 + $0x10] sm:$0xf]
  %v19 = vld [vmem:[%s0 + $0x14] sm:$0xf]
  %v20 = vld [vmem:[%s0 + $0x18] sm:$0xf]
  %v21 = vld [vmem:[%s0 + $0x1c] sm:$0xf]
  %v22 = vld [vmem:[%s0 + $0x20] sm:$0xf]
  %v23 = vld [vmem:[%s0 + $0x24] sm:$0xf]
  %v24 = vld [vmem:[%s0 + $0x28] sm:$0xf]
  %v25 = vld [vmem:[%s0 + $0x2c] sm:$0xf]
  %v26 = vld [vmem:[%s0 + $0x30] sm:$0xf]
  %v27 = vld [vmem:[%s0 + $0x34] sm:$0xf]
  %v28 = vld [vmem:[%s0 + $0x38] sm:$0xf]
  %v29 = vld [vmem:[%s0 + $0x3c] sm:$0xf]
  %v30 = vld [vmem:[%s0 + $0x40] sm:$0xf]
  %v31 = vld [vmem:[%s0 + $0x44] sm:$0xf]
  %v32 = vld [vmem:[%s0 + $0x48] sm:$0xf]
  %v33 = vld [vmem:[%s0 + $0x4c] sm:$0xf]
  %v34 = vld [vmem:[%s0 + $0x50] sm:$0xf]
  %v35 = vld [vmem:[%s0 + $0x54] sm:$0xf]
  %v36 = vld [vmem:[%s0 + $0x58] sm:$0xf]
  %v37 = vld [vmem:[%s0 + $0x5c] sm:$0xf]
  %v38 = vld [vmem:[%s0 + $0x60] sm:$0xf]
  %v39 = vld [vmem:[%s0 + $0x64] sm:$0xf]
  %v40 = vld [vmem:[%s0 + $0x68] sm:$0xf]
  %v41 = vld [vmem:[%s0 + $0x6c] sm:$0xf]
  %v42 = vld [vmem:[%s0 + $0x70] sm:$0xf]
  %v43 = vld [vmem:[%s0 + $0x74] sm:$0xf]
  %v44 = vld [vmem:[%s0 + $0x78] sm:$0xf]
  %v45 = vld [vmem:[%s0 + $0x7c] sm:$0xf]
  %v46 = vld [vmem:[%s0 + $0x80] sm:$0xf]
  %v47 = vld [vmem:[%s0 + $0x84] sm:$0xf]
  %v48 = vld [vmem:[%s0 + $0x88] sm:$0xf]
  %v49 = vld [vmem:[%s0 + $0x8c] sm:$0xf]
  %v50 = vld [vmem:[%s0 + $0x90] sm:$0xf]
  %v51 = vld [vmem:[%s0 + $0x94] sm:$0xf]
  %v52 = vld [vmem:[%s0 + $0x98] sm:$0xf]
  %v53 = vld [vmem:[%s0 + $0x9c] sm:$0xf]
  %v54 = vld [vmem:[%s0 + $0xa0] sm:$0xf]
  %v55 = vld [vmem:[%s0 + $0xa4] sm:$0xf]
  %v56 = vld [vmem:[%s0 + $0xa8] sm:$0xf]
  %v57 = vld [vmem:[%s0 + $0xac] sm:$0xf]
  %v58 = vld [vmem:[%s0 + $0xb0] sm:$0xf]
  %v59 = vld [vmem:[%s0 + $0xb4] sm:$0xf]
  %v60 = vld [vmem:[%s0 + $0xb8] sm:$0xf]
  %v61 = vld [vmem:[%s0 + $0xbc] sm:$0xf]
  %v62 = vld [vmem:[%s0 + $0xc0] sm:$0xf]
  %v63 = vld [vmem:[%s0 + $0xc4] sm:$0xf]
  %v64 = vld [vmem:[%s0 + $0xc8] sm:$0xf]
  %v65 = vld [vmem:[%s0 + $0xcc] sm:$0xf]
  %v66 = vld [vmem:[%s0 + $0xd0] sm:$0xf]
  %v67 = vld [vmem:[%s0 + $0xd4] sm:$0xf]
  %v68 = vld [vmem:[%s0 + $0xd8] sm:$0xf]
  %v69 = vld [vmem:[%s0 + $0xdc] sm:$0xf]
  %v70 = vld [vmem:[%s0 + $0xe0] sm:$0xf]
  %v71 = vld [vmem:[%s0 + $0xe4] sm:$0xf]
  %v72 = vld [vmem:[%s0 + $0xe8] sm:$0xf]
  %v73 = vld [vmem:[%s0 + $0xec] sm:$0xf]
  %v74 = vld [vmem:[%s0 + $0xf0] sm:$0xf]
  %v75 = vld [vmem:[%s0 + $0xf4] sm:$0xf]
  %v76 = vld [vmem:[%s0 + $0xf8] sm:$0xf]
  %v77 = vld [vmem:[%s0 + $0xfc] sm:$0xf]
  %v78 = vunpack.c.l.bf16 %v14
  %v79 = vunpack.c.l.bf16 %v15
  %v80 = vunpack.c.l.bf16 %v16
  %v81 = vunpack.c.l.bf16 %v17
  %v82 = vunpack.c.l.bf16 %v18
  %v83 = vunpack.c.l.bf16 %v19
  %v84 = vunpack.c.l.bf16 %v20
  %v85 = vunpack.c.l.bf16 %v21
  %v86 = vunpack.c.l.bf16 %v22
  %v87 = vunpack.c.l.bf16 %v23
  %v88 = vunpack.c.l.bf16 %v24
  %v89 = vunpack.c.l.bf16 %v25
  %v90 = vunpack.c.l.bf16 %v26
  %v91 = vunpack.c.l.bf16 %v27
  %v92 = vunpack.c.l.bf16 %v28
  %v93 = vunpack.c.l.bf16 %v29
  %v94 = vunpack.c.l.bf16 %v30
  %v95 = vunpack.c.l.bf16 %v31
  %v96 = vunpack.c.l.bf16 %v32
  %v97 = vunpack.c.l.bf16 %v33
  %v98 = vunpack.c.l.bf16 %v34
  %v99 = vunpack.c.l.bf16 %v35
  %v100 = vunpack.c.l.bf16 %v36
  %v101 = vunpack.c.l.bf16 %v37
  %v102 = vunpack.c.l.bf16 %v38
  %v103 = vunpack.c.l.bf16 %v39
  %v104 = vunpack.c.l.bf16 %v40
  %v105 = vunpack.c.l.bf16 %v41
  %v106 = vunpack.c.l.bf16 %v42
  %v107 = vunpack.c.l.bf16 %v43
  %v108 = vunpack.c.l.bf16 %v44
  %v109 = vunpack.c.l.bf16 %v45
  %v110 = vunpack.c.l.bf16 %v46
  %v111 = vunpack.c.l.bf16 %v47
  %v112 = vunpack.c.l.bf16 %v48
  %v113 = vunpack.c.l.bf16 %v49
  %v114 = vunpack.c.l.bf16 %v50
  %v115 = vunpack.c.l.bf16 %v51
  %v116 = vunpack.c.l.bf16 %v52
  %v117 = vunpack.c.l.bf16 %v53
  %v118 = vunpack.c.l.bf16 %v54
  %v119 = vunpack.c.l.bf16 %v55
  %v120 = vunpack.c.l.bf16 %v56
  %v121 = vunpack.c.l.bf16 %v57
  %v122 = vunpack.c.l.bf16 %v58
  %v123 = vunpack.c.l.bf16 %v59
  %v124 = vunpack.c.l.bf16 %v60
  %v125 = vunpack.c.l.bf16 %v61
  %v126 = vunpack.c.l.bf16 %v62
  %v127 = vunpack.c.l.bf16 %v63
  %v128 = vunpack.c.l.bf16 %v64
  %v129 = vunpack.c.l.bf16 %v65
  %v130 = vunpack.c.l.bf16 %v66
  %v131 = vunpack.c.l.bf16 %v67
  %v132 = vunpack.c.l.bf16 %v68
  %v133 = vunpack.c.l.bf16 %v69
  %v134 = vunpack.c.l.bf16 %v70
  %v135 = vunpack.c.l.bf16 %v71
  %v136 = vunpack.c.l.bf16 %v72
  %v137 = vunpack.c.l.bf16 %v73
  %v138 = vunpack.c.l.bf16 %v74
  %v139 = vunpack.c.l.bf16 %v75
  %v140 = vunpack.c.l.bf16 %v76
  %v141 = vunpack.c.l.bf16 %v77
  %v142 = vld [vmem:[%s1] sm:$0x1]
  %v144 = vlaneseq
  %v145 = vshrl.u32 %v144, 7
  %v146 = vsub.s32 0, %v145
  %v147 = vrot.slane %v142, %v146
  %v149 = vmul.f32 %v78, %v147
  %v150 = vmul.f32 %v79, %v147
  %v151 = vmul.f32 %v80, %v147
  %v152 = vmul.f32 %v81, %v147
  %v153 = vmul.f32 %v82, %v147
  %v154 = vmul.f32 %v83, %v147
  %v155 = vmul.f32 %v84, %v147
  %v156 = vmul.f32 %v85, %v147
  %v157 = vmul.f32 %v86, %v147
  %v158 = vmul.f32 %v87, %v147
  %v159 = vmul.f32 %v88, %v147
  %v160 = vmul.f32 %v89, %v147
  %v161 = vmul.f32 %v90, %v147
  %v162 = vmul.f32 %v91, %v147
  %v163 = vmul.f32 %v92, %v147
  %v164 = vmul.f32 %v93, %v147
  %v165 = vmul.f32 %v94, %v147
  %v166 = vmul.f32 %v95, %v147
  %v167 = vmul.f32 %v96, %v147
  %v168 = vmul.f32 %v97, %v147
  %v169 = vmul.f32 %v98, %v147
  %v170 = vmul.f32 %v99, %v147
  %v171 = vmul.f32 %v100, %v147
  %v172 = vmul.f32 %v101, %v147
  %v173 = vmul.f32 %v102, %v147
  %v174 = vmul.f32 %v103, %v147
  %v175 = vmul.f32 %v104, %v147
  %v176 = vmul.f32 %v105, %v147
  %v177 = vmul.f32 %v106, %v147
  %v178 = vmul.f32 %v107, %v147
  %v179 = vmul.f32 %v108, %v147
  %v180 = vmul.f32 %v109, %v147
  %v181 = vmul.f32 %v110, %v147
  %v182 = vmul.f32 %v111, %v147
  %v183 = vmul.f32 %v112, %v147
  %v184 = vmul.f32 %v113, %v147
  %v185 = vmul.f32 %v114, %v147
  %v186 = vmul.f32 %v115, %v147
  %v187 = vmul.f32 %v116, %v147
  %v188 = vmul.f32 %v117, %v147
  %v189 = vmul.f32 %v118, %v147
  %v190 = vmul.f32 %v119, %v147
  %v191 = vmul.f32 %v120, %v147
  %v192 = vmul.f32 %v121, %v147
  %v193 = vmul.f32 %v122, %v147
  %v194 = vmul.f32 %v123, %v147
  %v195 = vmul.f32 %v124, %v147
  %v196 = vmul.f32 %v125, %v147
  %v197 = vmul.f32 %v126, %v147
  %v198 = vmul.f32 %v127, %v147
  %v199 = vmul.f32 %v128, %v147
  %v200 = vmul.f32 %v129, %v147
  %v201 = vmul.f32 %v130, %v147
  %v202 = vmul.f32 %v131, %v147
  %v203 = vmul.f32 %v132, %v147
  %v204 = vmul.f32 %v133, %v147
  %v205 = vmul.f32 %v134, %v147
  %v206 = vmul.f32 %v135, %v147
  %v207 = vmul.f32 %v136, %v147
  %v208 = vmul.f32 %v137, %v147
  %v209 = vmul.f32 %v138, %v147
  %v210 = vmul.f32 %v139, %v147
  %v211 = vmul.f32 %v140, %v147
  %v212 = vmul.f32 %v141, %v147
  %v213 = vld [vmem:[%s2] sm:$0x1]
  %v215 = vlaneseq
  %v216 = vshrl.u32 %v215, 7
  %v217 = vsub.s32 0, %v216
  %v218 = vrot.slane %v213, %v217
  %v220 = vadd.f32 %v149, %v218
  %v221 = vadd.f32 %v150, %v218
  %v222 = vadd.f32 %v151, %v218
  %v223 = vadd.f32 %v152, %v218
  %v224 = vadd.f32 %v153, %v218
  %v225 = vadd.f32 %v154, %v218
  %v226 = vadd.f32 %v155, %v218
  %v227 = vadd.f32 %v156, %v218
  %v228 = vadd.f32 %v157, %v218
  %v229 = vadd.f32 %v158, %v218
  %v230 = vadd.f32 %v159, %v218
  %v231 = vadd.f32 %v160, %v218
  %v232 = vadd.f32 %v161, %v218
  %v233 = vadd.f32 %v162, %v218
  %v234 = vadd.f32 %v163, %v218
  %v235 = vadd.f32 %v164, %v218
  %v236 = vadd.f32 %v165, %v218
  %v237 = vadd.f32 %v166, %v218
  %v238 = vadd.f32 %v167, %v218
  %v239 = vadd.f32 %v168, %v218
  %v240 = vadd.f32 %v169, %v218
  %v241 = vadd.f32 %v170, %v218
  %v242 = vadd.f32 %v171, %v218
  %v243 = vadd.f32 %v172, %v218
  %v244 = vadd.f32 %v173, %v218
  %v245 = vadd.f32 %v174, %v218
  %v246 = vadd.f32 %v175, %v218
  %v247 = vadd.f32 %v176, %v218
  %v248 = vadd.f32 %v177, %v218
  %v249 = vadd.f32 %v178, %v218
  %v250 = vadd.f32 %v179, %v218
  %v251 = vadd.f32 %v180, %v218
  %v252 = vadd.f32 %v181, %v218
  %v253 = vadd.f32 %v182, %v218
  %v254 = vadd.f32 %v183, %v218
  %v255 = vadd.f32 %v184, %v218
  %v256 = vadd.f32 %v185, %v218
  %v257 = vadd.f32 %v186, %v218
  %v258 = vadd.f32 %v187, %v218
  %v259 = vadd.f32 %v188, %v218
  %v260 = vadd.f32 %v189, %v218
  %v261 = vadd.f32 %v190, %v218
  %v262 = vadd.f32 %v191, %v218
  %v263 = vadd.f32 %v192, %v218
  %v264 = vadd.f32 %v193, %v218
  %v265 = vadd.f32 %v194, %v218
  %v266 = vadd.f32 %v195, %v218
  %v267 = vadd.f32 %v196, %v218
  %v268 = vadd.f32 %v197, %v218
  %v269 = vadd.f32 %v198, %v218
  %v270 = vadd.f32 %v199, %v218
  %v271 = vadd.f32 %v200, %v218
  %v272 = vadd.f32 %v201, %v218
  %v273 = vadd.f32 %v202, %v218
  %v274 = vadd.f32 %v203, %v218
  %v275 = vadd.f32 %v204, %v218
  %v276 = vadd.f32 %v205, %v218
  %v277 = vadd.f32 %v206, %v218
  %v278 = vadd.f32 %v207, %v218
  %v279 = vadd.f32 %v208, %v218
  %v280 = vadd.f32 %v209, %v218
  %v281 = vadd.f32 %v210, %v218
  %v282 = vadd.f32 %v211, %v218
  %v283 = vadd.f32 %v212, %v218
  %v284 = vmax.f32 %v220, 0.0
  %v285 = vmax.f32 %v221, 0.0
  %v286 = vmax.f32 %v222, 0.0
  %v287 = vmax.f32 %v223, 0.0
  %v288 = vmax.f32 %v224, 0.0
  %v289 = vmax.f32 %v225, 0.0
  %v290 = vmax.f32 %v226, 0.0
  %v291 = vmax.f32 %v227, 0.0
  %v292 = vmax.f32 %v228, 0.0
  %v293 = vmax.f32 %v229, 0.0
  %v294 = vmax.f32 %v230, 0.0
  %v295 = vmax.f32 %v231, 0.0
  %v296 = vmax.f32 %v232, 0.0
  %v297 = vmax.f32 %v233, 0.0
  %v298 = vmax.f32 %v234, 0.0
  %v299 = vmax.f32 %v235, 0.0
  %v300 = vmax.f32 %v236, 0.0
  %v301 = vmax.f32 %v237, 0.0
  %v302 = vmax.f32 %v238, 0.0
  %v303 = vmax.f32 %v239, 0.0
  %v304 = vmax.f32 %v240, 0.0
  %v305 = vmax.f32 %v241, 0.0
  %v306 = vmax.f32 %v242, 0.0
  %v307 = vmax.f32 %v243, 0.0
  %v308 = vmax.f32 %v244, 0.0
  %v309 = vmax.f32 %v245, 0.0
  %v310 = vmax.f32 %v246, 0.0
  %v311 = vmax.f32 %v247, 0.0
  %v312 = vmax.f32 %v248, 0.0
  %v313 = vmax.f32 %v249, 0.0
  %v314 = vmax.f32 %v250, 0.0
  %v315 = vmax.f32 %v251, 0.0
  %v316 = vmax.f32 %v252, 0.0
  %v317 = vmax.f32 %v253, 0.0
  %v318 = vmax.f32 %v254, 0.0
  %v319 = vmax.f32 %v255, 0.0
  %v320 = vmax.f32 %v256, 0.0
  %v321 = vmax.f32 %v257, 0.0
  %v322 = vmax.f32 %v258, 0.0
  %v323 = vmax.f32 %v259, 0.0
  %v324 = vmax.f32 %v260, 0.0
  %v325 = vmax.f32 %v261, 0.0
  %v326 = vmax.f32 %v262, 0.0
  %v327 = vmax.f32 %v263, 0.0
  %v328 = vmax.f32 %v264, 0.0
  %v329 = vmax.f32 %v265, 0.0
  %v330 = vmax.f32 %v266, 0.0
  %v331 = vmax.f32 %v267, 0.0
  %v332 = vmax.f32 %v268, 0.0
  %v333 = vmax.f32 %v269, 0.0
  %v334 = vmax.f32 %v270, 0.0
  %v335 = vmax.f32 %v271, 0.0
  %v336 = vmax.f32 %v272, 0.0
  %v337 = vmax.f32 %v273, 0.0
  %v338 = vmax.f32 %v274, 0.0
  %v339 = vmax.f32 %v275, 0.0
  %v340 = vmax.f32 %v276, 0.0
  %v341 = vmax.f32 %v277, 0.0
  %v342 = vmax.f32 %v278, 0.0
  %v343 = vmax.f32 %v279, 0.0
  %v344 = vmax.f32 %v280, 0.0
  %v345 = vmax.f32 %v281, 0.0
  %v346 = vmax.f32 %v282, 0.0
  %v347 = vmax.f32 %v283, 0.0
  %348 = vst [vmem:[%s3] sm:$0xff] %v284
  %349 = vst [vmem:[%s3 + $0x8] sm:$0xff] %v285
  %350 = vst [vmem:[%s3 + $0x10] sm:$0xff] %v286
  %351 = vst [vmem:[%s3 + $0x18] sm:$0xff] %v287
  %352 = vst [vmem:[%s3 + $0x20] sm:$0xff] %v288
  %353 = vst [vmem:[%s3 + $0x28] sm:$0xff] %v289
  %354 = vst [vmem:[%s3 + $0x30] sm:$0xff] %v290
  %355 = vst [vmem:[%s3 + $0x38] sm:$0xff] %v291
  %356 = vst [vmem:[%s3 + $0x40] sm:$0xff] %v292
  %357 = vst [vmem:[%s3 + $0x48] sm:$0xff] %v293
  %358 = vst [vmem:[%s3 + $0x50] sm:$0xff] %v294
  %359 = vst [vmem:[%s3 + $0x58] sm:$0xff] %v295
  %360 = vst [vmem:[%s3 + $0x60] sm:$0xff] %v296
  %361 = vst [vmem:[%s3 + $0x68] sm:$0xff] %v297
  %362 = vst [vmem:[%s3 + $0x70] sm:$0xff] %v298
  %363 = vst [vmem:[%s3 + $0x78] sm:$0xff] %v299
  %364 = vst [vmem:[%s3 + $0x80] sm:$0xff] %v300
  %365 = vst [vmem:[%s3 + $0x88] sm:$0xff] %v301
  %366 = vst [vmem:[%s3 + $0x90] sm:$0xff] %v302
  %367 = vst [vmem:[%s3 + $0x98] sm:$0xff] %v303
  %368 = vst [vmem:[%s3 + $0xa0] sm:$0xff] %v304
  %369 = vst [vmem:[%s3 + $0xa8] sm:$0xff] %v305
  %370 = vst [vmem:[%s3 + $0xb0] sm:$0xff] %v306
  %371 = vst [vmem:[%s3 + $0xb8] sm:$0xff] %v307
  %372 = vst [vmem:[%s3 + $0xc0] sm:$0xff] %v308
  %373 = vst [vmem:[%s3 + $0xc8] sm:$0xff] %v309
  %374 = vst [vmem:[%s3 + $0xd0] sm:$0xff] %v310
  %375 = vst [vmem:[%s3 + $0xd8] sm:$0xff] %v311
  %376 = vst [vmem:[%s3 + $0xe0] sm:$0xff] %v312
  %377 = vst [vmem:[%s3 + $0xe8] sm:$0xff] %v313
  %378 = vst [vmem:[%s3 + $0xf0] sm:$0xff] %v314
  %379 = vst [vmem:[%s3 + $0xf8] sm:$0xff] %v315
  %380 = vst [vmem:[%s3 + $0x100] sm:$0xff] %v316
  %381 = vst [vmem:[%s3 + $0x108] sm:$0xff] %v317
  %382 = vst [vmem:[%s3 + $0x110] sm:$0xff] %v318
  %383 = vst [vmem:[%s3 + $0x118] sm:$0xff] %v319
  %384 = vst [vmem:[%s3 + $0x120] sm:$0xff] %v320
  %385 = vst [vmem:[%s3 + $0x128] sm:$0xff] %v321
  %386 = vst [vmem:[%s3 + $0x130] sm:$0xff] %v322
  %387 = vst [vmem:[%s3 + $0x138] sm:$0xff] %v323
  %388 = vst [vmem:[%s3 + $0x140] sm:$0xff] %v324
  %389 = vst [vmem:[%s3 + $0x148] sm:$0xff] %v325
  %390 = vst [vmem:[%s3 + $0x150] sm:$0xff] %v326
  %391 = vst [vmem:[%s3 + $0x158] sm:$0xff] %v327
  %392 = vst [vmem:[%s3 + $0x160] sm:$0xff] %v328
  %393 = vst [vmem:[%s3 + $0x168] sm:$0xff] %v329
  %394 = vst [vmem:[%s3 + $0x170] sm:$0xff] %v330
  %395 = vst [vmem:[%s3 + $0x178] sm:$0xff] %v331
  %396 = vst [vmem:[%s3 + $0x180] sm:$0xff] %v332
  %397 = vst [vmem:[%s3 + $0x188] sm:$0xff] %v333
  %398 = vst [vmem:[%s3 + $0x190] sm:$0xff] %v334
  %399 = vst [vmem:[%s3 + $0x198] sm:$0xff] %v335
  %400 = vst [vmem:[%s3 + $0x1a0] sm:$0xff] %v336
  %401 = vst [vmem:[%s3 + $0x1a8] sm:$0xff] %v337
  %402 = vst [vmem:[%s3 + $0x1b0] sm:$0xff] %v338
  %403 = vst [vmem:[%s3 + $0x1b8] sm:$0xff] %v339
  %404 = vst [vmem:[%s3 + $0x1c0] sm:$0xff] %v340
  %405 = vst [vmem:[%s3 + $0x1c8] sm:$0xff] %v341
  %406 = vst [vmem:[%s3 + $0x1d0] sm:$0xff] %v342
  %407 = vst [vmem:[%s3 + $0x1d8] sm:$0xff] %v343
  %408 = vst [vmem:[%s3 + $0x1e0] sm:$0xff] %v344
  %409 = vst [vmem:[%s3 + $0x1e8] sm:$0xff] %v345
  %410 = vst [vmem:[%s3 + $0x1f0] sm:$0xff] %v346
  %411 = vst [vmem:[%s3 + $0x1f8] sm:$0xff] %v347
  // Predicated region
  $region14: #{conv_bn_relu.3} parent=0 // pred_check
    _
  $region15: #{conv_bn_relu.3} parent=0 // pred_check_branch
    %413 = sbr.rel (0) target = $region17
  $region16: #{conv_bn_relu.3} parent=0 // pred_region
    _
  $region17: #{conv_bn_relu.3} parent=0 // pred_fallthru
    _
  // Predicated region
  $region18: #{conv_bn_relu.3} parent=0 // pred_check
    _
  $region19: #{conv_bn_relu.3} parent=0 // pred_check_branch
    %415 = sbr.rel (0) target = $region21
  $region20: #{conv_bn_relu.3} parent=0 // pred_region
    _
  $region21: #{conv_bn_relu.3} parent=0 // pred_fallthru
    _

</llo_original>
